<compile_context>
chip_gen: v7x
topology: tpu7x:2x2x1
jax: 0.10.0
libtpu: 0.0.40
codegen_flags: <defaults>
</compile_context>

<pallas_src>
import functools

import jax
import jax.numpy as jnp
from jax import lax
from jax.experimental import pallas as pl
from jax.experimental.pallas import tpu as pltpu


# ----------------------------------------------------------------------------
# Packed-parameter layout: one f32 slab [total_rows, 128-padded cols],
# 8-row-aligned segments -> single parameter DMA, sublane-aligned slices.
# ----------------------------------------------------------------------------
def _round_up(x, m):
    return (x + m - 1) // m * m


def make_param_layout(n_observation, no_nodes):
    """Row offsets of each tensor inside the packed slab.  Segment starts are
    8-aligned (sublane-aligned static slices); columns are padded to a full
    128-lane width so loads/stores of the slab are lane-dense."""
    w_cols = _round_up(max(n_observation, no_nodes), 128)
    layout = {}
    off = 0

    def seg(name, rows):
        nonlocal off
        layout[name] = off
        off = _round_up(off + rows, 8)

    seg("w1", n_observation)  # [n_obs, H]
    seg("b1", 1)              # [1, H]
    seg("w2", no_nodes)       # [H, H]
    seg("b2", 1)              # [1, H]
    seg("w3", no_nodes)       # [H, n_obs]
    seg("b3", 1)              # [1, n_obs]
    total_rows = _round_up(off, 8)
    return layout, total_rows, w_cols


def pack_params(params, n_observation, no_nodes):
    """Pack (w1,b1,w2,b2,w3,b3) -- weights already [in, out] (i.e. PyTorch
    Linear weights transposed) -- into a single f32 slab so the kernel
    performs one parameter DMA instead of six."""
    layout, total_rows, w_cols = make_param_layout(n_observation, no_nodes)
    slab = jnp.zeros((total_rows, w_cols), jnp.float32)
    names = ("w1", "b1", "w2", "b2", "w3", "b3")
    for name, arr in zip(names, params):
        slab = lax.dynamic_update_slice(
            slab, arr.astype(jnp.float32), (layout[name], 0)
        )
    return slab


# ----------------------------------------------------------------------------
# Kernel helpers
# ----------------------------------------------------------------------------
def _read_params(p_ref, layout, n_obs, hidden):
    """Static, sublane-aligned slices out of the packed VMEM slab."""
    w1 = p_ref[layout["w1"]:layout["w1"] + n_obs, 0:hidden]
    b1 = p_ref[layout["b1"]:layout["b1"] + 1, 0:hidden]
    w2 = p_ref[layout["w2"]:layout["w2"] + hidden, 0:hidden]
    b2 = p_ref[layout["b2"]:layout["b2"] + 1, 0:hidden]
    w3 = p_ref[layout["w3"]:layout["w3"] + hidden, 0:n_obs]
    b3 = p_ref[layout["b3"]:layout["b3"] + 1, 0:n_obs]
    return w1, b1, w2, b2, w3, b3


def _mlp(y, w1, b1, w2, b2, w3, b3):
    """b1/b2/b3 may be pre-broadcast to (batch, ...) by the caller."""
    h1 = jnp.tanh(jnp.dot(y, w1, preferred_element_type=jnp.float32) + b1)
    h2 = jnp.tanh(jnp.dot(h1, w2, preferred_element_type=jnp.float32) + b2)
    return jnp.dot(h2, w3, preferred_element_type=jnp.float32) + b3


# ----------------------------------------------------------------------------
# Kernel 1: single forward step  (matches nODEUnit.forward(t, y))
# ----------------------------------------------------------------------------
def _node_unit_step_kernel(y_ref, p_ref, o_ref, *, layout, n_obs, hidden):
    w1, b1, w2, b2, w3, b3 = _read_params(p_ref, layout, n_obs, hidden)
    o_ref[...] = _mlp(y_ref[...], w1, b1, w2, b2, w3, b3).astype(o_ref.dtype)


def node_unit_forward(t, y, packed_params, n_observation, no_nodes):
    """Pallas implementation of nODEUnit.forward(t, y). `t` is unused."""
    del t
    batch = y.shape[0]
    layout, _, _ = make_param_layout(n_observation, no_nodes)
    kernel = functools.partial(
        _node_unit_step_kernel, layout=layout, n_obs=n_observation, hidden=no_nodes
    )
    vmem = lambda: pl.BlockSpec(memory_space=pltpu.MemorySpace.VMEM)
    # Whole-array VMEM residency, no grid: a few KiB, far below any VMEM limit.
    return pl.pallas_call(
        kernel,
        out_shape=jax.ShapeDtypeStruct((batch, n_observation), jnp.float32),
        in_specs=[vmem(), vmem()],
        out_specs=vmem(),
    )(y, packed_params)


# ----------------------------------------------------------------------------
# Kernel 2: fused Euler integration loop (one pallas_call per solve).
# Weights are read from VMEM once; bias broadcasts and dt scaling are hoisted
# out of the loop; the time loop is partially unrolled.
# ----------------------------------------------------------------------------
def _node_unit_euler_kernel(
    y0_ref, p_ref, o_ref, *, layout, n_obs, hidden, n_steps, dt, unroll
):
    w1, b1, w2, b2, w3, b3 = _read_params(p_ref, layout, n_obs, hidden)
    batch = y0_ref.shape[0]

    # Hoist per-step work off the dependent chain:
    #   * bias broadcasts to full (batch, .) tiles, done once
    #   * dt folded into the last layer's weights/bias, done once
    b1b = jnp.broadcast_to(b1, (batch, hidden))
    b2b = jnp.broadcast_to(b2, (batch, hidden))
    w3s = w3 * jnp.float32(dt)
    b3b = jnp.broadcast_to(b3 * jnp.float32(dt), (batch, n_obs))

    def body(_, y):
        h1 = jnp.tanh(jnp.dot(y, w1, preferred_element_type=jnp.float32) + b1b)
        h2 = jnp.tanh(jnp.dot(h1, w2, preferred_element_type=jnp.float32) + b2b)
        return y + jnp.dot(h2, w3s, preferred_element_type=jnp.float32) + b3b

    yT = lax.fori_loop(0, n_steps, body, y0_ref[...], unroll=unroll)
    o_ref[...] = yT.astype(o_ref.dtype)


def node_unit_integrate(
    y0, packed_params, n_observation, no_nodes, n_steps, dt, unroll=8
):
    """Integrate dy/dt = net(y) with explicit Euler for `n_steps` steps of size
    `dt`, fully inside a single pallas_call (no per-step launch/DMA cost)."""
    batch = y0.shape[0]
    layout, _, _ = make_param_layout(n_observation, no_nodes)
    unroll = max(1, min(int(unroll), int(n_steps)))
    kernel = functools.partial(
        _node_unit_euler_kernel,
        layout=layout,
        n_obs=n_observation,
        hidden=no_nodes,
        n_steps=int(n_steps),
        dt=float(dt),
        unroll=unroll,
    )
    vmem = lambda: pl.BlockSpec(memory_space=pltpu.MemorySpace.VMEM)
    return pl.pallas_call(
        kernel,
        out_shape=jax.ShapeDtypeStruct((batch, n_observation), jnp.float32),
        in_specs=[vmem(), vmem()],
        out_specs=vmem(),
    )(y0, packed_params)


# ----------------------------------------------------------------------------
# Init + pure-JAX references
# ----------------------------------------------------------------------------
def init_node_unit_params(key, n_observation, no_nodes):
    """Matches torch.nn.init.normal_(std=0.1) weights, zero biases.
    Weights stored already transposed to [in, out]."""
    k1, k2, k3 = jax.random.split(key, 3)
    w1 = 0.1 * jax.random.normal(k1, (n_observation, no_nodes), jnp.float32)
    b1 = jnp.zeros((1, no_nodes), jnp.float32)
    w2 = 0.1 * jax.random.normal(k2, (no_nodes, no_nodes), jnp.float32)
    b2 = jnp.zeros((1, no_nodes), jnp.float32)
    w3 = 0.1 * jax.random.normal(k3, (no_nodes, n_observation), jnp.float32)
    b3 = jnp.zeros((1, n_observation), jnp.float32)
    return (w1, b1, w2, b2, w3, b3)


def node_unit_ref(t, y, params):
    del t
    w1, b1, w2, b2, w3, b3 = params
    h1 = jnp.tanh(y @ w1 + b1)
    h2 = jnp.tanh(h1 @ w2 + b2)
    return h2 @ w3 + b3


def node_unit_integrate_ref(y0, params, n_steps, dt):
    def body(_, y):
        return y + dt * node_unit_ref(0.0, y, params)

    return lax.fori_loop(0, n_steps, body, y0)


# ----------------------------------------------------------------------------
if __name__ == "__main__":
    n_observation = 16
    no_nodes = 32
    batch = 8

    key = jax.random.PRNGKey(0)
    k_params, k_y = jax.random.split(key)

    params = init_node_unit_params(k_params, n_observation, no_nodes)
    packed = pack_params(params, n_observation, no_nodes)
    y = jax.random.normal(k_y, (batch, n_observation), jnp.float32)
    t = jnp.float32(0.0)  # unused by the net, kept for API parity

    # Single forward step (== nODEUnit.forward).
    out = node_unit_forward(t, y, packed, n_observation, no_nodes)
    out = jax.block_until_ready(out)
    ref = node_unit_ref(t, y, params)
    assert out.shape == (batch, n_observation)
    assert jnp.allclose(out, ref, atol=1e-5, rtol=1e-5)

    # Fused time-loop solve: one pallas_call for the whole integration.
    n_steps, dt = 64, 0.05
    y_final = node_unit_integrate(
        y, packed, n_observation, no_nodes, n_steps, dt, unroll=8
    )
    y_final = jax.block_until_ready(y_final)
    ref_final = node_unit_integrate_ref(y, params, n_steps, dt)
    assert y_final.shape == (batch, n_observation)
    assert jnp.allclose(y_final, ref_final, atol=1e-4, rtol=1e-4)

    print("KERNEL_OK")
</pallas_src>

<mosaic_0001>
module attributes {stable_mosaic.version = 11 : i64} {
  func.func @_node_unit_step_kernel(%arg0: memref<8x16xf32, #tpu.memory_space<vmem>>, %arg1: memref<104x128xf32, #tpu.memory_space<vmem>>, %arg2: memref<8x16xf32, #tpu.memory_space<vmem>>) attributes {dimension_semantics = [], scalar_prefetch = 0 : i64, scratch_operands = 0 : i64, tpu.core_type = #tpu.core_type<tc>} {
    %c0 = arith.constant 0 : index
    %c0_0 = arith.constant 0 : index
    %0 = vector.load %arg1[%c0, %c0_0] : memref<104x128xf32, #tpu.memory_space<vmem>>, vector<16x32xf32>
    %c16 = arith.constant 16 : index
    %c0_1 = arith.constant 0 : index
    %1 = vector.load %arg1[%c16, %c0_1] : memref<104x128xf32, #tpu.memory_space<vmem>>, vector<1x32xf32>
    %c24 = arith.constant 24 : index
    %c0_2 = arith.constant 0 : index
    %2 = vector.load %arg1[%c24, %c0_2] : memref<104x128xf32, #tpu.memory_space<vmem>>, vector<32x32xf32>
    %c56 = arith.constant 56 : index
    %c0_3 = arith.constant 0 : index
    %3 = vector.load %arg1[%c56, %c0_3] : memref<104x128xf32, #tpu.memory_space<vmem>>, vector<1x32xf32>
    %c64 = arith.constant 64 : index
    %c0_4 = arith.constant 0 : index
    %4 = vector.load %arg1[%c64, %c0_4] : memref<104x128xf32, #tpu.memory_space<vmem>>, vector<32x16xf32>
    %c96 = arith.constant 96 : index
    %c0_5 = arith.constant 0 : index
    %5 = vector.load %arg1[%c96, %c0_5] : memref<104x128xf32, #tpu.memory_space<vmem>>, vector<1x16xf32>
    %c0_6 = arith.constant 0 : index
    %c0_7 = arith.constant 0 : index
    %6 = vector.load %arg0[%c0_6, %c0_7] : memref<8x16xf32, #tpu.memory_space<vmem>>, vector<8x16xf32>
    %cst = arith.constant dense<0.000000e+00> : vector<8x32xf32>
    %7 = tpu.matmul %6, %0, %cst {dimension_numbers = #tpu.dot_dimension_numbers<[1], [0], [0], [1], [0, 0, 1, 1], [], []>} : vector<8x16xf32>, vector<16x32xf32>, vector<8x32xf32> -> vector<8x32xf32>
    %8 = vector.broadcast %1 : vector<1x32xf32> to vector<8x32xf32>
    %9 = arith.addf %7, %8 : vector<8x32xf32>
    %10 = math.tanh %9 : vector<8x32xf32>
    %cst_8 = arith.constant dense<0.000000e+00> : vector<8x32xf32>
    %11 = tpu.matmul %10, %2, %cst_8 {dimension_numbers = #tpu.dot_dimension_numbers<[1], [0], [0], [1], [0, 0, 1, 1], [], []>} : vector<8x32xf32>, vector<32x32xf32>, vector<8x32xf32> -> vector<8x32xf32>
    %12 = vector.broadcast %3 : vector<1x32xf32> to vector<8x32xf32>
    %13 = arith.addf %11, %12 : vector<8x32xf32>
    %14 = math.tanh %13 : vector<8x32xf32>
    %cst_9 = arith.constant dense<0.000000e+00> : vector<8x16xf32>
    %15 = tpu.matmul %14, %4, %cst_9 {dimension_numbers = #tpu.dot_dimension_numbers<[1], [0], [0], [1], [0, 0, 1, 1], [], []>} : vector<8x32xf32>, vector<32x16xf32>, vector<8x16xf32> -> vector<8x16xf32>
    %16 = vector.broadcast %5 : vector<1x16xf32> to vector<8x16xf32>
    %17 = arith.addf %15, %16 : vector<8x16xf32>
    %c0_10 = arith.constant 0 : index
    %c0_11 = arith.constant 0 : index
    %18 = vector.load %arg2[%c0_10, %c0_11] : memref<8x16xf32, #tpu.memory_space<vmem>>, vector<8x16xf32>
    tpu.vector_store %arg2[%c0_10, %c0_11], %17 {strides = array<i32>} : memref<8x16xf32, #tpu.memory_space<vmem>>, vector<8x16xf32>,
    return
  }
}

</mosaic_0001>

<llo_original>
// kernel: tpu_custom_call.1
$region0: #{tpu_custom_call.1}
  #allocation0 [shape = 'u32[]', space=smem, size = 0x4, offset = 0x4, fixed_abs, tag = 'smem constant byte address 0x4 - core index']
  #allocation1 [shape = 'u32[144,128]{1,0:T(1,128)}', space=vmem, size = 0x12000, scoped, tag = 'internal scratch']
  %s0 = inlined_call_operand.hbm [shape: f32[8,16], index: 0, kind: input, shape index: {}]
  %s1 = inlined_call_operand.hbm [shape: f32[104,128], index: 1, kind: input, shape index: {}]
  %s2 = inlined_call_operand.hbm [shape: f32[8,16], index: 2, kind: output, shape index: {}]
  %s3 = sld [smem:[#allocation0]]
  $region26: #{tpu_custom_call.1} parent=0
    _
  %s5 = ssub.s32 1, %s3
  %s6 = scalar_select 0, %s5, %s3
  $region1: #{tpu_custom_call.1} parent=0
    #allocation2 [shape = 'u8[4096]{0}', space=vmem, size = 0x1000, scoped, tag = 'input window, operand 0, single buffered']
    #allocation3 [shape = 's32[1]{0}', space=sflag, size = 0x4, scoped, tag = 'scoped memory for tpu_custom_call.1']
    #allocation4 [shape = 's32[1]{0}', space=sflag, size = 0x4, scoped, tag = 'scoped memory for tpu_custom_call.1']
    #allocation5 [shape = 'u8[53248]{0}', space=vmem, size = 0xd000, scoped, tag = 'input window, operand 1, single buffered']
    #allocation6 [shape = 's32[1]{0}', space=sflag, size = 0x4, scoped, tag = 'scoped memory for tpu_custom_call.1']
    #allocation7 [shape = 'u8[4096]{0}', space=vmem, size = 0x1000, scoped, tag = 'output window, operand 0, single buffered']
    %7 = vsyncpa [#allocation3], 0
    %8 = vsyncpa [#allocation6], 0
    %9 = vsyncpa [#allocation4], 0
    // Predicated region
    $region2: #{tpu_custom_call.1} parent=1 // pred_check
      _
    $region3: #{tpu_custom_call.1} parent=1 // pred_check_branch
      %11 = sbr.rel (0) target = $region5
    $region4: #{tpu_custom_call.1} parent=1 // pred_region
      %s13 = ssub.s32 128, 128
      %14 = vsyncadd [#allocation3], %s13
      %s16 = sshll.u32 [#allocation2], 4
      %s17 = int_to_ptr.vmem [resolvable:$true] %s16
      %19 = dma.hbm_to_vmem [thread:$0]  %s0, 128, %s17, [#allocation3]
    $region5: #{tpu_custom_call.1} parent=1 // pred_fallthru
      _
    // Predicated region
    $region6: #{tpu_custom_call.1} parent=1 // pred_check
      _
    $region7: #{tpu_custom_call.1} parent=1 // pred_check_branch
      %21 = sbr.rel (0) target = $region9
    $region8: #{tpu_custom_call.1} parent=1 // pred_region
      %s23 = ssub.s32 1664, 1664
      %24 = vsyncadd [#allocation6], %s23
      %s25 = sshll.u32 [#allocation5], 4
      %s26 = int_to_ptr.vmem [resolvable:$true] %s25
      %31 = dma.hbm_to_vmem [thread:$0]  %s1, 1664, %s26, [#allocation6], 128, 128, 8
    $region9: #{tpu_custom_call.1} parent=1 // pred_fallthru
      _
    // Predicated region
    $region10: #{tpu_custom_call.1} parent=1 // pred_check
      _
    $region11: #{tpu_custom_call.1} parent=1 // pred_check_branch
      %33 = sbr.rel (0) target = $region13
    $region12: #{tpu_custom_call.1} parent=1 // pred_region
      %34 = dma.done [#allocation3], 128
    $region13: #{tpu_custom_call.1} parent=1 // pred_fallthru
      _
    // Predicated region
    $region14: #{tpu_custom_call.1} parent=1 // pred_check
      _
    $region15: #{tpu_custom_call.1} parent=1 // pred_check_branch
      %36 = sbr.rel (0) target = $region17
    $region16: #{tpu_custom_call.1} parent=1 // pred_region
      %37 = dma.done [#allocation6], 1664
    $region17: #{tpu_custom_call.1} parent=1 // pred_fallthru
      _
    %v38 = vld [vmem:[#allocation5] sm:$0xff]
    %v39 = vld [vmem:[#allocation5 + $0x8] sm:$0xff]
    %v40 = vld [vmem:[#allocation5 + $0x10] sm:$0x1]
    %v41 = vld [vmem:[#allocation5 + $0x18] sm:$0xff]
    %v42 = vld [vmem:[#allocation5 + $0x20] sm:$0xff]
    %v43 = vld [vmem:[#allocation5 + $0x28] sm:$0xff]
    %v44 = vld [vmem:[#allocation5 + $0x30] sm:$0xff]
    %v45 = vld [vmem:[#allocation5 + $0x38] sm:$0x1]
    %v46 = vld [vmem:[#allocation5 + $0x40] sm:$0xff]
    %v47 = vld [vmem:[#allocation5 + $0x48] sm:$0xff]
    %v48 = vld [vmem:[#allocation5 + $0x50] sm:$0xff]
    %v49 = vld [vmem:[#allocation5 + $0x58] sm:$0xff]
    %v50 = vld [vmem:[#allocation5 + $0x60] sm:$0x1]
    %v51 = vld [vmem:[#allocation2] sm:$0xff]
    %v52 = vlaneseq
    %v53 = vshrl.u32 %v52, 7
    %v54 = vsub.s32 0, %v53
    %v55 = vrot.slane %v40, %v54
    %vm56 = vcmask 130048
    %v58 = vsel %vm56, %v51, 0
    %60 = vmatprep.subr.mxu0 0.0
    %61 = vmatpush1.msra.mxu0 %v38
    %62 = vmatprep.subr.mxu0 0.0
    %63 = vmatpush1.msra.mxu0 %v39
    %64 = vmatprep.subr.mxu0 0.0
    %65 = vmatpush1.msra.mxu0 0.0
    %66 = vmatprep.subr.mxu0 0.0
    %67 = vmatpush1.msra.mxu0 0.0
    %68 = vmatprep.subr.mxu0 0.0
    %69 = vmatpush1.msra.mxu0 0.0
    %70 = vmatprep.subr.mxu0 0.0
    %71 = vmatpush1.msra.mxu0 0.0
    %72 = vmatprep.subr.mxu0 0.0
    %73 = vmatpush1.msra.mxu0 0.0
    %74 = vmatprep.subr.mxu0 0.0
    %75 = vmatpush1.msra.mxu0 0.0
    %76 = vmatprep.subr.mxu0 0.0
    %77 = vmatpush1.msra.mxu0 0.0
    %78 = vmatprep.subr.mxu0 0.0
    %79 = vmatpush1.msra.mxu0 0.0
    %80 = vmatprep.subr.mxu0 0.0
    %81 = vmatpush1.msra.mxu0 0.0
    %82 = vmatprep.subr.mxu0 0.0
    %83 = vmatpush1.msra.mxu0 0.0
    %84 = vmatprep.subr.mxu0 0.0
    %85 = vmatpush1.msra.mxu0 0.0
    %86 = vmatprep.subr.mxu0 0.0
    %87 = vmatpush1.msra.mxu0 0.0
    %88 = vmatprep.subr.mxu0 0.0
    %89 = vmatpush1.msra.mxu0 0.0
    %90 = vmatprep.subr.mxu0 0.0
    %91 = vmatpush1.msra.mxu0 0.0
    %92 = vmatprep.subr.mxu0 0.0
    %93 = vmatpush1.msra.mxu0 0.0
    %94 = vmatprep.subr.mxu0 0.0
    %95 = vmatpush1.msra.mxu0 0.0
    %96 = vmatprep.subr.mxu0 0.0
    %97 = vmatpush1.msra.mxu0 0.0
    %98 = vmatprep.subr.mxu0 0.0
    %99 = vmatpush1.msra.mxu0 0.0
    %100 = vmatprep.subr.mxu0 0.0
    %101 = vmatpush1.msra.mxu0 0.0
    %102 = vmatprep.subr.mxu0 0.0
    %103 = vmatpush1.msra.mxu0 0.0
    %104 = vmatprep.subr.mxu0 0.0
    %105 = vmatpush1.msra.mxu0 0.0
    %106 = vmatprep.subr.mxu0 0.0
    %107 = vmatpush1.msra.mxu0 0.0
    %108 = vmatprep.subr.mxu0 0.0
    %109 = vmatpush1.msra.mxu0 0.0
    %110 = vmatprep.subr.mxu0 0.0
    %111 = vmatpush1.msra.mxu0 0.0
    %112 = vmatprep.subr.mxu0 0.0
    %113 = vmatpush1.msra.mxu0 0.0
    %114 = vmatprep.subr.mxu0 0.0
    %115 = vmatpush1.msra.mxu0 0.0
    %116 = vmatprep.subr.mxu0 0.0
    %117 = vmatpush1.msra.mxu0 0.0
    %118 = vmatprep.subr.mxu0 0.0
    %119 = vmatpush1.msra.mxu0 0.0
    %120 = vmatprep.subr.mxu0 0.0
    %121 = vmatpush1.msra.mxu0 0.0
    %122 = vmatprep.subr.mxu0 0.0
    %123 = vmatpush1.msra.mxu0 0.0
    %124 = vmatprep.mubr.f32.mxu0 0.0
    %125 = vmatmul.mubr.f32.gmra.mrb[0].mxu0 %v58
    %v126 = vpop.f32.mrb[0].mxu0
    %v127 = vadd.f32 %v55, %v126
    %v128 = vpop.f32.mrb[0].mxu0
    %129 = vdwg.mxu0
    %v130 = vtanh.pop %v127
    %v131 = vlaneseq
    %v132 = vshrl.u32 %v131, 7
    %v133 = vsub.s32 0, %v132
    %v134 = vrot.slane %v45, %v133
    %vm135 = vcmask 261120
    %v137 = vsel %vm135, %v130, 0
    %139 = vmatprep.subr.mxu0 0.0
    %140 = vmatpush1.msra.mxu0 %v41
    %141 = vmatprep.subr.mxu0 0.0
    %142 = vmatpush1.msra.mxu0 %v42
    %143 = vmatprep.subr.mxu0 0.0
    %144 = vmatpush1.msra.mxu0 %v43
    %145 = vmatprep.subr.mxu0 0.0
    %146 = vmatpush1.msra.mxu0 %v44
    %147 = vmatprep.subr.mxu0 0.0
    %148 = vmatpush1.msra.mxu0 0.0
    %149 = vmatprep.subr.mxu0 0.0
    %150 = vmatpush1.msra.mxu0 0.0
    %151 = vmatprep.subr.mxu0 0.0
    %152 = vmatpush1.msra.mxu0 0.0
    %153 = vmatprep.subr.mxu0 0.0
    %154 = vmatpush1.msra.mxu0 0.0
    %155 = vmatprep.subr.mxu0 0.0
    %156 = vmatpush1.msra.mxu0 0.0
    %157 = vmatprep.subr.mxu0 0.0
    %158 = vmatpush1.msra.mxu0 0.0
    %159 = vmatprep.subr.mxu0 0.0
    %160 = vmatpush1.msra.mxu0 0.0
    %161 = vmatprep.subr.mxu0 0.0
    %162 = vmatpush1.msra.mxu0 0.0
    %163 = vmatprep.subr.mxu0 0.0
    %164 = vmatpush1.msra.mxu0 0.0
    %165 = vmatprep.subr.mxu0 0.0
    %166 = vmatpush1.msra.mxu0 0.0
    %167 = vmatprep.subr.mxu0 0.0
    %168 = vmatpush1.msra.mxu0 0.0
    %169 = vmatprep.subr.mxu0 0.0
    %170 = vmatpush1.msra.mxu0 0.0
    %171 = vmatprep.subr.mxu0 0.0
    %172 = vmatpush1.msra.mxu0 0.0
    %173 = vmatprep.subr.mxu0 0.0
    %174 = vmatpush1.msra.mxu0 0.0
    %175 = vmatprep.subr.mxu0 0.0
    %176 = vmatpush1.msra.mxu0 0.0
    %177 = vmatprep.subr.mxu0 0.0
    %178 = vmatpush1.msra.mxu0 0.0
    %179 = vmatprep.subr.mxu0 0.0
    %180 = vmatpush1.msra.mxu0 0.0
    %181 = vmatprep.subr.mxu0 0.0
    %182 = vmatpush1.msra.mxu0 0.0
    %183 = vmatprep.subr.mxu0 0.0
    %184 = vmatpush1.msra.mxu0 0.0
    %185 = vmatprep.subr.mxu0 0.0
    %186 = vmatpush1.msra.mxu0 0.0
    %187 = vmatprep.subr.mxu0 0.0
    %188 = vmatpush1.msra.mxu0 0.0
    %189 = vmatprep.subr.mxu0 0.0
    %190 = vmatpush1.msra.mxu0 0.0
    %191 = vmatprep.subr.mxu0 0.0
    %192 = vmatpush1.msra.mxu0 0.0
    %193 = vmatprep.subr.mxu0 0.0
    %194 = vmatpush1.msra.mxu0 0.0
    %195 = vmatprep.subr.mxu0 0.0
    %196 = vmatpush1.msra.mxu0 0.0
    %197 = vmatprep.subr.mxu0 0.0
    %198 = vmatpush1.msra.mxu0 0.0
    %199 = vmatprep.subr.mxu0 0.0
    %200 = vmatpush1.msra.mxu0 0.0
    %201 = vmatprep.subr.mxu0 0.0
    %202 = vmatpush1.msra.mxu0 0.0
    %203 = vmatprep.mubr.f32.mxu0 0.0
    %204 = vmatmul.mubr.f32.gmra.mrb[0].mxu0 %v137
    %v205 = vpop.f32.mrb[0].mxu0
    %v206 = vadd.f32 %v134, %v205
    %v207 = vpop.f32.mrb[0].mxu0
    %208 = vdwg.mxu0
    %v209 = vtanh.pop %v206
    %v210 = vlaneseq
    %v211 = vshrl.u32 %v210, 7
    %v212 = vsub.s32 0, %v211
    %v213 = vrot.slane %v50, %v212
    %v215 = vsel %vm135, %v209, 0
    %217 = vmatprep.subr.mxu0 0.0
    %218 = vmatpush1.msra.mxu0 %v46
    %219 = vmatprep.subr.mxu0 0.0
    %220 = vmatpush1.msra.mxu0 %v47
    %221 = vmatprep.subr.mxu0 0.0
    %222 = vmatpush1.msra.mxu0 %v48
    %223 = vmatprep.subr.mxu0 0.0
    %224 = vmatpush1.msra.mxu0 %v49
    %225 = vmatprep.subr.mxu0 0.0
    %226 = vmatpush1.msra.mxu0 0.0
    %227 = vmatprep.subr.mxu0 0.0
    %228 = vmatpush1.msra.mxu0 0.0
    %229 = vmatprep.subr.mxu0 0.0
    %230 = vmatpush1.msra.mxu0 0.0
    %231 = vmatprep.subr.mxu0 0.0
    %232 = vmatpush1.msra.mxu0 0.0
    %233 = vmatprep.subr.mxu0 0.0
    %234 = vmatpush1.msra.mxu0 0.0
    %235 = vmatprep.subr.mxu0 0.0
    %236 = vmatpush1.msra.mxu0 0.0
    %237 = vmatprep.subr.mxu0 0.0
    %238 = vmatpush1.msra.mxu0 0.0
    %239 = vmatprep.subr.mxu0 0.0
    %240 = vmatpush1.msra.mxu0 0.0
    %241 = vmatprep.subr.mxu0 0.0
    %242 = vmatpush1.msra.mxu0 0.0
    %243 = vmatprep.subr.mxu0 0.0
    %244 = vmatpush1.msra.mxu0 0.0
    %245 = vmatprep.subr.mxu0 0.0
    %246 = vmatpush1.msra.mxu0 0.0
    %247 = vmatprep.subr.mxu0 0.0
    %248 = vmatpush1.msra.mxu0 0.0
    %249 = vmatprep.subr.mxu0 0.0
    %250 = vmatpush1.msra.mxu0 0.0
    %251 = vmatprep.subr.mxu0 0.0
    %252 = vmatpush1.msra.mxu0 0.0
    %253 = vmatprep.subr.mxu0 0.0
    %254 = vmatpush1.msra.mxu0 0.0
    %255 = vmatprep.subr.mxu0 0.0
    %256 = vmatpush1.msra.mxu0 0.0
    %257 = vmatprep.subr.mxu0 0.0
    %258 = vmatpush1.msra.mxu0 0.0
    %259 = vmatprep.subr.mxu0 0.0
    %260 = vmatpush1.msra.mxu0 0.0
    %261 = vmatprep.subr.mxu0 0.0
    %262 = vmatpush1.msra.mxu0 0.0
    %263 = vmatprep.subr.mxu0 0.0
    %264 = vmatpush1.msra.mxu0 0.0
    %265 = vmatprep.subr.mxu0 0.0
    %266 = vmatpush1.msra.mxu0 0.0
    %267 = vmatprep.subr.mxu0 0.0
    %268 = vmatpush1.msra.mxu0 0.0
    %269 = vmatprep.subr.mxu0 0.0
    %270 = vmatpush1.msra.mxu0 0.0
    %271 = vmatprep.subr.mxu0 0.0
    %272 = vmatpush1.msra.mxu0 0.0
    %273 = vmatprep.subr.mxu0 0.0
    %274 = vmatpush1.msra.mxu0 0.0
    %275 = vmatprep.subr.mxu0 0.0
    %276 = vmatpush1.msra.mxu0 0.0
    %277 = vmatprep.subr.mxu0 0.0
    %278 = vmatpush1.msra.mxu0 0.0
    %279 = vmatprep.subr.mxu0 0.0
    %280 = vmatpush1.msra.mxu0 0.0
    %281 = vmatprep.mubr.f32.mxu0 0.0
    %282 = vmatmul.mubr.f32.gmra.mrb[0].mxu0 %v215
    %v283 = vpop.f32.mrb[0].mxu0
    %v284 = vadd.f32 %v213, %v283
    %v285 = vpop.f32.mrb[0].mxu0
    %286 = vdwg.mxu0
    %287 = vst.msk [vmem:[#allocation7] sm:$0xff] %vm56, %v284
    // Predicated region
    $region18: #{tpu_custom_call.1} parent=1 // pred_check
      _
    $region19: #{tpu_custom_call.1} parent=1 // pred_check_branch
      %289 = sbr.rel (0) target = $region21
    $region20: #{tpu_custom_call.1} parent=1 // pred_region
      %s291 = ssub.s32 128, 128
      %292 = vsyncadd [#allocation4], %s291
      %s294 = sshll.u32 [#allocation7], 4
      %s295 = int_to_ptr.vmem [resolvable:$true] %s294
      %297 = dma.vmem_to_hbm [thread:$0]  %s295, 128, %s2, [#allocation4]
    $region21: #{tpu_custom_call.1} parent=1 // pred_fallthru
      _
    // Predicated region
    $region22: #{tpu_custom_call.1} parent=1 // pred_check
      _
    $region23: #{tpu_custom_call.1} parent=1 // pred_check_branch
      %299 = sbr.rel (0) target = $region25
    $region24: #{tpu_custom_call.1} parent=1 // pred_region
      %300 = dma.done [#allocation4], 128
    $region25: #{tpu_custom_call.1} parent=1 // pred_fallthru
      _
    %301 = vsyncpa [#allocation3], 1
    %302 = vsyncpa [#allocation6], 1
    %303 = vsyncpa [#allocation4], 1

</llo_original>
